<compile_context>
chip_gen: v6e
topology: v6e:2x2x1
jax: 0.10.0
libtpu: 0.0.40
codegen_flags: <defaults>
</compile_context>

<pallas_src>
import functools

import jax
import jax.numpy as jnp
import numpy as np
from jax.experimental import pallas as pl
from jax.experimental.pallas import tpu as pltpu

LANE = 128
SUBLANE = 8


def _round_up(v, m):
    return (v + m - 1) // m * m


# --------------------------------------------------------------------------
# Pass 1: scale = std(x, dim=0, ddof=1) * exp(selectors)   (global over batch)
# --------------------------------------------------------------------------
def _make_scale_kernel(batch_size: int):
    inv_n = 1.0 / float(batch_size)
    inv_nm1 = 1.0 / float(batch_size - 1)

    def kernel(x_ref, sel_ref, scale_ref, sum_ref, sq_ref):
        @pl.when(pl.program_id(0) == 0)
        def _init():
            sum_ref[...] = jnp.zeros_like(sum_ref)
            sq_ref[...] = jnp.zeros_like(sq_ref)

        xt = x_ref[...]  # (TB, Lp) f32; padded rows/cols are exactly zero
        sum_ref[...] += jnp.sum(xt, axis=0, keepdims=True)
        sq_ref[...] += jnp.sum(xt * xt, axis=0, keepdims=True)

        @pl.when(pl.program_id(0) == pl.num_programs(0) - 1)
        def _finalize():
            s = sum_ref[...]
            # unbiased variance (ddof=1), matching torch.Tensor.std default
            var = (sq_ref[...] - s * s * inv_n) * inv_nm1
            std = jnp.sqrt(jnp.maximum(var, 0.0))
            scale_ref[...] = std * jnp.exp(sel_ref[...])

    return kernel


# --------------------------------------------------------------------------
# Pass 2: noise FMA + dense decoder chain (ELU ... ELU, sigmoid on last layer)
# --------------------------------------------------------------------------
def _make_decoder_kernel(n_layers: int):
    def kernel(*refs):
        scale_ref = refs[0]
        x_ref = refs[1]
        rand_ref = refs[2]
        w_refs = refs[3:3 + n_layers]
        b_refs = refs[3 + n_layers:3 + 2 * n_layers]
        out_ref = refs[3 + 2 * n_layers]

        # Selection noise prologue: single FMA with the precomputed (1, L) scale.
        h = x_ref[...] + scale_ref[...] * rand_ref[...]  # f32

        for l in range(n_layers):
            # bf16 MXU operands, f32 accumulation; bias-add + activation fused
            # on the f32 accumulator before the next matmul.
            acc = jnp.dot(h.astype(jnp.bfloat16), w_refs[l][...],
                          preferred_element_type=jnp.float32)
            acc = acc + b_refs[l][...]
            if l < n_layers - 1:
                h = jnp.where(acc > 0, acc, jnp.exp(acc) - 1.0)  # ELU (alpha=1)
            else:
                h = 1.0 / (1.0 + jnp.exp(-acc))                  # Sigmoid

        out_ref[...] = h.astype(out_ref.dtype)

    return kernel


# --------------------------------------------------------------------------
# Host wrapper
# --------------------------------------------------------------------------
def filter_decoder_forward(x, rand, selectors, weights, biases, *,
                           batch_tile=512, interpret=False):
    """FilterDecoder forward.

    x:         (B, dim_latent)  f32
    rand:      (B, dim_latent)  f32  (standard-normal samples)
    selectors: (dim_latent,)    f32  (Selection.selectors parameter)
    weights:   list of (in_features, out_features) f32  (pre-transposed Linear)
    biases:    list of (out_features,) f32
    """
    B, L = x.shape
    assert B >= 2, "Selection std (ddof=1) requires batch >= 2"
    n_layers = len(weights)
    f32 = jnp.float32

    # ---- lane-dense padding of every feature dim to a multiple of 128 ----
    dims = [L] + [w.shape[1] for w in weights]
    dims_p = [_round_up(d, LANE) for d in dims]
    Lp, Dout_p = dims_p[0], dims_p[-1]

    # ---- batch tiling (sublane-aligned, large tiles amortize grid overhead) ----
    TB = min(batch_tile, _round_up(B, SUBLANE))
    TB = _round_up(TB, SUBLANE)
    Bp = _round_up(B, TB)
    n_bt = Bp // TB

    xp = jnp.zeros((Bp, Lp), f32).at[:B, :L].set(x.astype(f32))
    rp = jnp.zeros((Bp, Lp), f32).at[:B, :L].set(rand.astype(f32))
    selp = jnp.zeros((1, Lp), f32).at[0, :L].set(selectors.astype(f32))

    wps, bps = [], []
    for l in range(n_layers):
        kp, np_ = dims_p[l], dims_p[l + 1]
        k, n = weights[l].shape
        wps.append(jnp.zeros((kp, np_), jnp.bfloat16)
                   .at[:k, :n].set(weights[l].astype(jnp.bfloat16)))
        bps.append(jnp.zeros((1, np_), f32)
                   .at[0, :n].set(biases[l].astype(f32)))

    # -------------------- pass 1: noise scale vector --------------------
    scale = pl.pallas_call(
        _make_scale_kernel(B),
        out_shape=jax.ShapeDtypeStruct((1, Lp), f32),
        grid_spec=pltpu.PrefetchScalarGridSpec(
            num_scalar_prefetch=0,
            grid=(n_bt,),
            in_specs=[
                pl.BlockSpec((TB, Lp), lambda i: (i, 0)),   # x tile (streamed)
                pl.BlockSpec((1, Lp), lambda i: (0, 0)),    # selectors (resident)
            ],
            out_specs=pl.BlockSpec((1, Lp), lambda i: (0, 0)),
            scratch_shapes=[pltpu.VMEM((1, Lp), f32),       # sum accumulator
                            pltpu.VMEM((1, Lp), f32)],      # sumsq accumulator
        ),
        compiler_params=pltpu.CompilerParams(
            dimension_semantics=("arbitrary",)),            # global reduction axis
        interpret=interpret,
    )(xp, selp)

    # -------------------- pass 2: decoder MLP --------------------
    # Explicit VMEM budget (v7x physical is 64 MiB; default scoped limit 32 MiB).
    bytes_weights = sum(int(w.size) * 2 for w in wps) + sum(int(b.size) * 4 for b in bps)
    bytes_stream = 2 * (TB * Lp * 4 * 2 + TB * Dout_p * 4)   # double-buffered x/rand/out
    bytes_act = 4 * TB * max(dims_p) * 4                     # f32 activation headroom
    vmem_limit = int(min(max(2 * (bytes_weights + bytes_stream + bytes_act),
                             32 * 1024 * 1024),
                         56 * 1024 * 1024))

    flops = 2 * Bp * sum(dims_p[l] * dims_p[l + 1] for l in range(n_layers))
    transcendentals = Bp * sum(dims_p[1:])                   # exp per ELU/sigmoid elem
    bytes_accessed = bytes_weights + (2 * Bp * Lp + Bp * Dout_p) * 4

    in_specs = [
        pl.BlockSpec((1, Lp), lambda i: (0, 0)),             # scale (resident)
        pl.BlockSpec((TB, Lp), lambda i: (i, 0)),            # x tile (streamed)
        pl.BlockSpec((TB, Lp), lambda i: (i, 0)),            # rand tile (streamed)
    ]
    for l in range(n_layers):                                # weights: VMEM-resident
        kp, np_ = dims_p[l], dims_p[l + 1]
        in_specs.append(pl.BlockSpec((kp, np_), lambda i: (0, 0)))
    for l in range(n_layers):                                # biases: VMEM-resident
        np_ = dims_p[l + 1]
        in_specs.append(pl.BlockSpec((1, np_), lambda i: (0, 0)))

    out_p = pl.pallas_call(
        _make_decoder_kernel(n_layers),
        out_shape=jax.ShapeDtypeStruct((Bp, Dout_p), f32),
        grid_spec=pltpu.PrefetchScalarGridSpec(
            num_scalar_prefetch=0,
            grid=(n_bt,),
            in_specs=in_specs,
            out_specs=pl.BlockSpec((TB, Dout_p), lambda i: (i, 0)),
        ),
        compiler_params=pltpu.CompilerParams(
            dimension_semantics=("parallel",),               # batch tiles independent
            vmem_limit_bytes=vmem_limit),
        cost_estimate=pl.CostEstimate(flops=flops,
                                      transcendentals=transcendentals,
                                      bytes_accessed=bytes_accessed),
        interpret=interpret,
    )(scale, xp, rp, *wps, *bps)

    return out_p[:B, :dims[-1]]


# --------------------------------------------------------------------------
# Pure-JAX reference (f32) mirroring the PyTorch module
# --------------------------------------------------------------------------
def _reference_forward(x, rand, selectors, weights, biases):
    std = jnp.std(x, axis=0, ddof=1)
    h = x + std * jnp.exp(selectors) * rand
    n_layers = len(weights)
    for l in range(n_layers):
        a = h @ weights[l] + biases[l]
        if l < n_layers - 1:
            h = jnp.where(a > 0, a, jnp.exp(a) - 1.0)
        else:
            h = jax.nn.sigmoid(a)
    return h


if __name__ == "__main__":
    key = jax.random.PRNGKey(0)

    # Small shapes consistent with FilterDecoder: low-dim latent -> high-dim output.
    batch = 16
    dim_latent = 8
    dim_dense = [32, 64]
    dim_output = 96

    dims = [dim_latent] + dim_dense + [dim_output]
    n_layers = len(dims) - 1

    keys = jax.random.split(key, 3 + 2 * n_layers)
    x = jax.random.normal(keys[0], (batch, dim_latent), jnp.float32)
    # torch.randn in the original forward, generated deterministically here.
    rand = jax.random.normal(keys[1], (batch, dim_latent), jnp.float32)
    # Selection.selectors parameter (module default init is -10.0; use values
    # that actually exercise the noise path in the check).
    selectors = -1.0 + 0.1 * jax.random.normal(keys[2], (dim_latent,), jnp.float32)

    weights, biases = [], []
    for l in range(n_layers):
        bound = 1.0 / float(np.sqrt(dims[l]))
        weights.append(jax.random.uniform(keys[3 + 2 * l], (dims[l], dims[l + 1]),
                                          jnp.float32, -bound, bound))
        biases.append(jax.random.uniform(keys[4 + 2 * l], (dims[l + 1],),
                                         jnp.float32, -bound, bound))

    out = filter_decoder_forward(x, rand, selectors, weights, biases)
    out = jax.block_until_ready(out)

    ref = _reference_forward(x, rand, selectors, weights, biases)
    err = float(jnp.max(jnp.abs(out - ref)))
    assert out.shape == (batch, dim_output), out.shape
    assert np.isfinite(err) and err < 5e-2, f"max abs err too large: {err}"
    print("KERNEL_OK")
</pallas_src>

<mosaic_0001>
module attributes {stable_mosaic.version = 11 : i64} {
  func.func @kernel(%arg0: i32, %arg1: memref<16x128xf32, #tpu.memory_space<vmem>>, %arg2: memref<1x128xf32, #tpu.memory_space<vmem>>, %arg3: memref<1x128xf32, #tpu.memory_space<vmem>>, %arg4: memref<1x128xf32, #tpu.memory_space<vmem>>, %arg5: memref<1x128xf32, #tpu.memory_space<vmem>>) attributes {dimension_semantics = [#tpu.dimension_semantics<arbitrary>], iteration_bounds = array<i64: 1>, scalar_prefetch = 0 : i64, scratch_operands = 2 : i64, tpu.core_type = #tpu.core_type<tc>, window_params = [{transform_indices = @transform_0, window_bounds = array<i64: 16, 128>}, {pipeline_mode = #tpu.pipeline_mode<synchronous>, transform_indices = @transform_1, window_bounds = array<i64: 1, 128>}, {pipeline_mode = #tpu.pipeline_mode<synchronous>, transform_indices = @transform_2, window_bounds = array<i64: 1, 128>}]} {
    %c0_i32 = arith.constant 0 : i32
    %0 = arith.cmpi eq, %arg0, %c0_i32 : i32
    %1 = arith.extui %0 : i1 to i32
    %c0_i32_0 = arith.constant 0 : i32
    %2 = arith.cmpi ne, %1, %c0_i32_0 : i32
    scf.if %2 {
      %cst_13 = arith.constant 0.000000e+00 : f32
      %18 = vector.broadcast %cst_13 : f32 to vector<1x128xf32>
      %c0_14 = arith.constant 0 : index
      %c0_15 = arith.constant 0 : index
      %19 = vector.load %arg4[%c0_14, %c0_15] : memref<1x128xf32, #tpu.memory_space<vmem>>, vector<1x128xf32>
      tpu.vector_store %arg4[%c0_14, %c0_15], %18 {strides = array<i32>} : memref<1x128xf32, #tpu.memory_space<vmem>>, vector<1x128xf32>,
      %cst_16 = arith.constant 0.000000e+00 : f32
      %20 = vector.broadcast %cst_16 : f32 to vector<1x128xf32>
      %c0_17 = arith.constant 0 : index
      %c0_18 = arith.constant 0 : index
      %21 = vector.load %arg5[%c0_17, %c0_18] : memref<1x128xf32, #tpu.memory_space<vmem>>, vector<1x128xf32>
      tpu.vector_store %arg5[%c0_17, %c0_18], %20 {strides = array<i32>} : memref<1x128xf32, #tpu.memory_space<vmem>>, vector<1x128xf32>,
    } else {
    }
    %c0 = arith.constant 0 : index
    %c0_1 = arith.constant 0 : index
    %3 = vector.load %arg1[%c0, %c0_1] : memref<16x128xf32, #tpu.memory_space<vmem>>, vector<16x128xf32>
    %c0_2 = arith.constant 0 : index
    %c0_3 = arith.constant 0 : index
    %4 = vector.load %arg4[%c0_2, %c0_3] : memref<1x128xf32, #tpu.memory_space<vmem>>, vector<1x128xf32>
    %cst = arith.constant dense<0.000000e+00> : vector<128xf32>
    %5 = vector.multi_reduction <add>, %3, %cst [0] : vector<16x128xf32> to vector<128xf32>
    %6 = vector.shape_cast %5 : vector<128xf32> to vector<1x128xf32>
    %7 = arith.addf %4, %6 : vector<1x128xf32>
    %c0_4 = arith.constant 0 : index
    %c0_5 = arith.constant 0 : index
    %8 = vector.load %arg4[%c0_4, %c0_5] : memref<1x128xf32, #tpu.memory_space<vmem>>, vector<1x128xf32>
    tpu.vector_store %arg4[%c0_4, %c0_5], %7 {strides = array<i32>} : memref<1x128xf32, #tpu.memory_space<vmem>>, vector<1x128xf32>,
    %c0_6 = arith.constant 0 : index
    %c0_7 = arith.constant 0 : index
    %9 = vector.load %arg5[%c0_6, %c0_7] : memref<1x128xf32, #tpu.memory_space<vmem>>, vector<1x128xf32>
    %10 = arith.mulf %3, %3 : vector<16x128xf32>
    %cst_8 = arith.constant dense<0.000000e+00> : vector<128xf32>
    %11 = vector.multi_reduction <add>, %10, %cst_8 [0] : vector<16x128xf32> to vector<128xf32>
    %12 = vector.shape_cast %11 : vector<128xf32> to vector<1x128xf32>
    %13 = arith.addf %9, %12 : vector<1x128xf32>
    %c0_9 = arith.constant 0 : index
    %c0_10 = arith.constant 0 : index
    %14 = vector.load %arg5[%c0_9, %c0_10] : memref<1x128xf32, #tpu.memory_space<vmem>>, vector<1x128xf32>
    tpu.vector_store %arg5[%c0_9, %c0_10], %13 {strides = array<i32>} : memref<1x128xf32, #tpu.memory_space<vmem>>, vector<1x128xf32>,
    %c0_i32_11 = arith.constant 0 : i32
    %15 = arith.cmpi eq, %arg0, %c0_i32_11 : i32
    %16 = arith.extui %15 : i1 to i32
    %c0_i32_12 = arith.constant 0 : i32
    %17 = arith.cmpi ne, %16, %c0_i32_12 : i32
    scf.if %17 {
      %c0_13 = arith.constant 0 : index
      %c0_14 = arith.constant 0 : index
      %18 = vector.load %arg4[%c0_13, %c0_14] : memref<1x128xf32, #tpu.memory_space<vmem>>, vector<1x128xf32>
      %c0_15 = arith.constant 0 : index
      %c0_16 = arith.constant 0 : index
      %19 = vector.load %arg5[%c0_15, %c0_16] : memref<1x128xf32, #tpu.memory_space<vmem>>, vector<1x128xf32>
      %20 = arith.mulf %18, %18 : vector<1x128xf32>
      %cst_17 = arith.constant 6.250000e-02 : f32
      %21 = vector.broadcast %cst_17 : f32 to vector<1x128xf32>
      %22 = arith.mulf %20, %21 : vector<1x128xf32>
      %23 = arith.subf %19, %22 : vector<1x128xf32>
      %cst_18 = arith.constant 0.0666666701 : f32
      %24 = vector.broadcast %cst_18 : f32 to vector<1x128xf32>
      %25 = arith.mulf %23, %24 : vector<1x128xf32>
      %cst_19 = arith.constant 0.000000e+00 : f32
      %26 = vector.broadcast %cst_19 : f32 to vector<1x128xf32>
      %27 = arith.maximumf %25, %26 : vector<1x128xf32>
      %28 = math.sqrt %27 : vector<1x128xf32>
      %c0_20 = arith.constant 0 : index
      %c0_21 = arith.constant 0 : index
      %29 = vector.load %arg2[%c0_20, %c0_21] : memref<1x128xf32, #tpu.memory_space<vmem>>, vector<1x128xf32>
      %30 = math.exp %29 : vector<1x128xf32>
      %31 = arith.mulf %28, %30 : vector<1x128xf32>
      %c0_22 = arith.constant 0 : index
      %c0_23 = arith.constant 0 : index
      %32 = vector.load %arg3[%c0_22, %c0_23] : memref<1x128xf32, #tpu.memory_space<vmem>>, vector<1x128xf32>
      tpu.vector_store %arg3[%c0_22, %c0_23], %31 {strides = array<i32>} : memref<1x128xf32, #tpu.memory_space<vmem>>, vector<1x128xf32>,
    } else {
    }
    return
  }
  func.func @transform_0(%arg0: i32) -> (i32, i32) {
    %c0_i32 = arith.constant 0 : i32
    %c0_i32_0 = arith.constant 0 : i32
    return %arg0, %c0_i32 : i32, i32
  }
  func.func @transform_1(%arg0: i32) -> (i32, i32) {
    %c0_i32 = arith.constant 0 : i32
    %c0_i32_0 = arith.constant 0 : i32
    %c0_i32_1 = arith.constant 0 : i32
    return %c0_i32, %c0_i32_0 : i32, i32
  }
  func.func @transform_2(%arg0: i32) -> (i32, i32) {
    %c0_i32 = arith.constant 0 : i32
    %c0_i32_0 = arith.constant 0 : i32
    %c0_i32_1 = arith.constant 0 : i32
    return %c0_i32, %c0_i32_0 : i32, i32
  }
}

</mosaic_0001>

<llo_original>
// kernel: tpu_custom_call.1
$region0: #{tpu_custom_call.1}
  #allocation0 [shape = 'u32[]', space=smem, size = 0x4, offset = 0x4, fixed_abs, tag = 'smem constant byte address 0x4 - core index']
  #allocation1 [shape = 'u32[144,128]{1,0:T(1,128)}', space=vmem, size = 0x12000, scoped, tag = 'internal scratch']
  #allocation2 [shape = 'f32[1,128]{1,0:T(1,128)}', space=vmem, size = 0x200, scoped, tag = 'scratch operand']
  #allocation3 [shape = 'f32[1,128]{1,0:T(1,128)}', space=vmem, size = 0x200, scoped, tag = 'scratch operand']
  %s0 = inlined_call_operand.hbm [shape: f32[16,128], index: 0, kind: input, shape index: {}]
  %s1 = inlined_call_operand.vmem [shape: f32[1,128], index: 1, kind: input, shape index: {}]
  %s2 = inlined_call_operand.hbm [shape: f32[1,128], index: 2, kind: output, shape index: {}]
  %s3 = sld [smem:[#allocation0]]
  $region30: #{tpu_custom_call.1} parent=0
    _
  %s5 = ssub.s32 1, %s3
  %s6 = scalar_select 0, %s5, %s3
  $region1: #{tpu_custom_call.1} parent=0
    #allocation4 [shape = 'u8[8192]{0}', space=vmem, size = 0x2000, scoped, tag = 'input window, operand 0, single buffered']
    #allocation5 [shape = 's32[1]{0}', space=sflag, size = 0x4, scoped, tag = 'scoped memory for tpu_custom_call.1']
    #allocation6 [shape = 's32[1]{0}', space=sflag, size = 0x4, scoped, tag = 'scoped memory for tpu_custom_call.1']
    #allocation7 [shape = 'u8[512]{0}', space=vmem, size = 0x400, scoped, tag = 'output window, operand 0, single buffered']
    %7 = vsyncpa [#allocation5], 0
    %8 = vsyncpa [#allocation6], 0
    // Predicated region
    $region2: #{tpu_custom_call.1} parent=1 // pred_check
      _
    $region3: #{tpu_custom_call.1} parent=1 // pred_check_branch
      %10 = sbr.rel (0) target = $region5
    $region4: #{tpu_custom_call.1} parent=1 // pred_region
      %s12 = ssub.s32 256, 256
      %13 = vsyncadd [#allocation5], %s12
      %s14 = sshll.u32 [#allocation4], 4
      %s15 = int_to_ptr.vmem [resolvable:$true] %s14
      %20 = dma.hbm_to_vmem [thread:$0]  %s0, 256, %s15, [#allocation5], 128, 128, 8
    $region5: #{tpu_custom_call.1} parent=1 // pred_fallthru
      _
    // Predicated region
    $region6: #{tpu_custom_call.1} parent=1 // pred_check
      _
    $region7: #{tpu_custom_call.1} parent=1 // pred_check_branch
      %22 = sbr.rel (0) target = $region9
    $region8: #{tpu_custom_call.1} parent=1 // pred_region
      _
    $region9: #{tpu_custom_call.1} parent=1 // pred_fallthru
      _
    // Predicated region
    $region10: #{tpu_custom_call.1} parent=1 // pred_check
      _
    $region11: #{tpu_custom_call.1} parent=1 // pred_check_branch
      %24 = sbr.rel (0) target = $region13
    $region12: #{tpu_custom_call.1} parent=1 // pred_region
      %25 = dma.done [#allocation5], 256
    $region13: #{tpu_custom_call.1} parent=1 // pred_fallthru
      _
    %p26 = scmp.eq.s32.totalorder 0, 0
    // Predicated region
    $region14: #{tpu_custom_call.1} parent=1 // pred_check
      %p27 = pneg %p26
    $region15: #{tpu_custom_call.1} parent=1 // pred_check_branch
      %29 = sbr.rel (%p27) target = $region17
    $region16: #{tpu_custom_call.1} parent=1 // pred_region
      %30 = vst [vmem:[#allocation2] sm:$0x1] 0.0
      %31 = vst [vmem:[#allocation3] sm:$0x1] 0.0
    $region17: #{tpu_custom_call.1} parent=1 // pred_fallthru
      _
    %v32 = vld [vmem:[#allocation4] sm:$0xff]
    %v33 = vld [vmem:[#allocation4 + $0x8] sm:$0xff]
    %v34 = vld [vmem:[#allocation2] sm:$0x1]
    %v35 = vadd.f32 %v32, %v33
    %v36 = vrot.slane %v35, 4
    %v37 = vadd.f32 %v35, %v36
    %v38 = vrot.slane %v37, 2
    %v39 = vadd.f32 %v37, %v38
    %v40 = vrot.slane %v39, 1
    %v41 = vadd.f32 %v39, %v40
    %v42 = vadd.f32 %v34, %v41
    %43 = vst [vmem:[#allocation2] sm:$0x1] %v42
    %v44 = vld [vmem:[#allocation3] sm:$0x1]
    %v45 = vmul.f32 %v32, %v32
    %v46 = vmul.f32 %v33, %v33
    %v47 = vadd.f32 %v45, %v46
    %v48 = vrot.slane %v47, 4
    %v49 = vadd.f32 %v47, %v48
    %v50 = vrot.slane %v49, 2
    %v51 = vadd.f32 %v49, %v50
    %v52 = vrot.slane %v51, 1
    %v53 = vadd.f32 %v51, %v52
    %v54 = vadd.f32 %v44, %v53
    %55 = vst [vmem:[#allocation3] sm:$0x1] %v54
    // Predicated region
    $region18: #{tpu_custom_call.1} parent=1 // pred_check
      %p56 = pneg %p26
    $region19: #{tpu_custom_call.1} parent=1 // pred_check_branch
      %58 = sbr.rel (%p56) target = $region21
    $region20: #{tpu_custom_call.1} parent=1 // pred_region
      %v59 = vld [vmem:[#allocation2] sm:$0x1]
      %v60 = vld [vmem:[#allocation3] sm:$0x1]
      %v61 = vmul.f32 %v59, %v59
      %v62 = vmul.f32 %v61, 0.0625
      %v63 = vsub.f32 %v60, %v62
      %v64 = vmul.f32 %v63, 0.06666667
      %v65 = vmax.f32 %v64, 0.0
      %v66 = vrsqrt.pop %v65
      %v67 = vmul.f32 %v65, %v66
      %vm68 = vcmp.eq.f32.partialorder %v65, inf
      %v69 = vsel %vm68, %v65, %v67
      %vm70 = vcmp.eq.f32.partialorder %v65, 0.0
      %v71 = vand.u32 %v65, 2147483648
      %v72 = vsel %vm70, %v71, %v69
      %v73 = vld [vmem:[%s1] sm:$0x1]
      %v74 = vmul.f32 %v73, 1.442695
      %v75 = vpow.pop %v74
      %v76 = vmul.f32 %v72, %v75
      %77 = vst [vmem:[#allocation7] sm:$0x1] %v76
    $region21: #{tpu_custom_call.1} parent=1 // pred_fallthru
      _
    // Predicated region
    $region22: #{tpu_custom_call.1} parent=1 // pred_check
      _
    $region23: #{tpu_custom_call.1} parent=1 // pred_check_branch
      %79 = sbr.rel (0) target = $region25
    $region24: #{tpu_custom_call.1} parent=1 // pred_region
      %s81 = ssub.s32 16, 16
      %82 = vsyncadd [#allocation6], %s81
      %s84 = sshll.u32 [#allocation7], 4
      %s85 = int_to_ptr.vmem [resolvable:$true] %s84
      %87 = dma.vmem_to_hbm [thread:$0]  %s85, 16, %s2, [#allocation6]
    $region25: #{tpu_custom_call.1} parent=1 // pred_fallthru
      _
    // Predicated region
    $region26: #{tpu_custom_call.1} parent=1 // pred_check
      _
    $region27: #{tpu_custom_call.1} parent=1 // pred_check_branch
      %89 = sbr.rel (0) target = $region29
    $region28: #{tpu_custom_call.1} parent=1 // pred_region
      %90 = dma.done [#allocation6], 16
    $region29: #{tpu_custom_call.1} parent=1 // pred_fallthru
      _
    %91 = vsyncpa [#allocation5], 1
    %92 = vsyncpa [#allocation6], 1

</llo_original>
